<compile_context>
chip_gen: v7x
topology: tpu7x:2x2x1
jax: 0.10.0
libtpu: 0.0.40
codegen_flags: <defaults>
</compile_context>

<pallas_src>
import functools

import jax
import jax.numpy as jnp
import numpy as np
from jax.experimental import pallas as pl
from jax.experimental.pallas import tpu as pltpu

_SUBLANES = 8
_LANES = 128


def _tv_kernel(x_ref, wmask_ref, out_ref, *, blk, num_slices, w,
               inv_count_h, inv_count_w):
    # x_ref block: (blk, H*W), lane-dense.  Upcast once (no-op for f32 input).
    xv = x_ref[...].astype(jnp.float32)

    # Ragged last block: zero the out-of-range slices (their internal diffs
    # are then exactly zero).  Statically removed when blk divides num_slices.
    if num_slices % blk != 0:
        rows = (jax.lax.broadcasted_iota(jnp.int32, (blk, 1), 0)
                + pl.program_id(0) * blk)
        xv = jnp.where(rows < num_slices, xv, 0.0)

    # h-direction: flat neighbours W apart.  Every such pair is a valid
    # vertical neighbour inside one slice, so no mask is needed.
    h_tv = jnp.sum(jnp.abs(xv[:, w:] - xv[:, :-w]))

    # w-direction: adjacent flat neighbours; wmask (0/1, broadcast over
    # sublanes) zeroes the pairs that straddle an image-row boundary.
    w_tv = jnp.sum(jnp.abs(xv[:, 1:] - xv[:, :-1]) * wmask_ref[...])

    # Pre-normalized per-block partial, broadcast over a full (8,128) tile so
    # the store is a single unmasked, lane-dense vector store.
    part = h_tv * inv_count_h + w_tv * inv_count_w
    out_ref[...] = jnp.full((1, _SUBLANES, _LANES), part, dtype=jnp.float32)


def _vmem_budgets():
    """Returns (kernel VMEM budget, scoped vmem_limit_bytes) for this chip."""
    phys = None
    try:
        phys = getattr(pltpu.get_tpu_info(), "vmem_capacity_bytes", None)
    except Exception:
        phys = None
    if phys is not None and phys >= 100 * 1024 * 1024:
        # v5e / v6e: 128 MiB physical VMEM -> bigger blocks, 64 MiB scoped.
        return 40 * 1024 * 1024, 64 * 1024 * 1024
    # v7x-class (64 MiB physical) or unknown: stay conservative.
    return 20 * 1024 * 1024, 40 * 1024 * 1024


def _pick_block_slices(num_slices, flat_len, itemsize, budget_bytes):
    """Slices/block so 2 dbl-buffered inputs + ~4 f32 temporaries fit budget.

    Accounts for (8,128) tile padding of the VMEM block (lanes rounded up to
    128), not the raw element count.
    """
    lane_pad = pl.cdiv(flat_len, _LANES) * _LANES
    per_slice = 2 * lane_pad * itemsize + 4 * lane_pad * 4
    blk = max(1, int(budget_bytes // per_slice))
    if blk >= num_slices:
        return num_slices                       # single, ragged-free block
    blk = max(_SUBLANES, (blk // _SUBLANES) * _SUBLANES)   # sublane-aligned
    return min(blk, num_slices)


def tv_loss(x, tv_loss_weight: float = 1.0):
    """Pallas TPU implementation of TVLoss.forward.  x: (N, C, H, W)."""
    n, c, h, w = x.shape
    flat = h * w
    num_slices = n * c
    count_h = (h - 1) * w
    count_w = h * (w - 1)
    # Degenerate H==1 / W==1 follow the PyTorch module's 0/0 -> nan behavior.
    inv_count_h = 1.0 / count_h if count_h else float("nan")
    inv_count_w = 1.0 / count_w if count_w else float("nan")

    # Free (metadata) reshape -> lane-dense layout; no padded HBM copy.
    x_flat = x.reshape(num_slices, flat)

    budget, vmem_limit = _vmem_budgets()
    blk = _pick_block_slices(num_slices, flat, x.dtype.itemsize, budget)
    num_blocks = int(pl.cdiv(num_slices, blk))

    # 0/1 mask over adjacent flat pairs: zero where the pair straddles an
    # image-row boundary (column == W-1).  Tiny; constant index_map so it is
    # DMA'd once and stays resident.
    col = np.arange(flat - 1) % w
    wmask = jnp.asarray((col != (w - 1)).astype(np.float32)[None, :])

    kernel = functools.partial(
        _tv_kernel, blk=blk, num_slices=num_slices, w=w,
        inv_count_h=inv_count_h, inv_count_w=inv_count_w)

    cost = pl.CostEstimate(
        flops=6 * num_slices * flat,
        transcendentals=0,
        bytes_accessed=int(x_flat.size) * x_flat.dtype.itemsize
        + 4 * (flat - 1) + num_blocks * _SUBLANES * _LANES * 4,
    )

    parts = pl.pallas_call(
        kernel,
        out_shape=jax.ShapeDtypeStruct((num_blocks, _SUBLANES, _LANES),
                                       jnp.float32),
        grid=(num_blocks,),
        in_specs=[
            pl.BlockSpec((blk, flat), lambda i: (i, 0)),
            pl.BlockSpec((1, flat - 1), lambda i: (0, 0)),
        ],
        out_specs=pl.BlockSpec((1, _SUBLANES, _LANES), lambda i: (i, 0, 0)),
        compiler_params=pltpu.CompilerParams(
            dimension_semantics=("parallel",),
            vmem_limit_bytes=vmem_limit,
        ),
        cost_estimate=cost,
    )(x_flat, wmask)

    return tv_loss_weight * jnp.sum(parts[:, 0, 0]) / n


def tv_loss_ref(x, tv_loss_weight: float = 1.0):
    """Pure-JAX reference (mirrors the PyTorch forward)."""
    n, _, h, w = x.shape
    count_h = (h - 1) * w
    count_w = h * (w - 1)
    xf = x.astype(jnp.float32)
    h_tv = jnp.sum(jnp.abs(xf[:, :, 1:, :] - xf[:, :, : h - 1, :]))
    w_tv = jnp.sum(jnp.abs(xf[:, :, :, 1:] - xf[:, :, :, : w - 1]))
    return tv_loss_weight * (h_tv / count_h + w_tv / count_w) / n


if __name__ == "__main__":
    key = jax.random.PRNGKey(0)
    x = jax.random.normal(key, (2, 4, 16, 16), dtype=jnp.float32)

    out = tv_loss(x, tv_loss_weight=1.0)
    out = jax.block_until_ready(out)

    ref = tv_loss_ref(x, tv_loss_weight=1.0)
    assert jnp.allclose(out, ref, rtol=1e-5, atol=1e-5), (out, ref)

    print("KERNEL_OK")
</pallas_src>

<mosaic_0001>
module attributes {stable_mosaic.version = 11 : i64} {
  func.func @_tv_kernel(%arg0: i32, %arg1: memref<8x256xf32, #tpu.memory_space<vmem>>, %arg2: memref<1x255xf32, #tpu.memory_space<vmem>>, %arg3: memref<1x8x128xf32, #tpu.memory_space<vmem>>) attributes {dimension_semantics = [#tpu.dimension_semantics<parallel>], iteration_bounds = array<i64: 1>, scalar_prefetch = 0 : i64, scratch_operands = 0 : i64, tpu.core_type = #tpu.core_type<tc>, window_params = [{transform_indices = @transform_0, window_bounds = array<i64: 8, 256>}, {pipeline_mode = #tpu.pipeline_mode<synchronous>, transform_indices = @transform_1, window_bounds = array<i64: 1, 255>}, {transform_indices = @transform_2, window_bounds = array<i64: 1, 8, 128>}]} {
    %c0 = arith.constant 0 : index
    %c0_0 = arith.constant 0 : index
    %0 = vector.load %arg1[%c0, %c0_0] : memref<8x256xf32, #tpu.memory_space<vmem>>, vector<8x256xf32>
    %1 = vector.extract_strided_slice %0 {offsets = [0, 16], sizes = [8, 240], strides = [1, 1]} : vector<8x256xf32> to vector<8x240xf32>
    %2 = vector.extract_strided_slice %0 {offsets = [0, 0], sizes = [8, 240], strides = [1, 1]} : vector<8x256xf32> to vector<8x240xf32>
    %3 = arith.subf %1, %2 : vector<8x240xf32>
    %4 = math.absf %3 : vector<8x240xf32>
    %5 = vector.shape_cast %4 : vector<8x240xf32> to vector<1x8x240xf32>
    %cst = arith.constant dense<0.000000e+00> : vector<1xf32>
    %6 = vector.multi_reduction <add>, %5, %cst [1, 2] : vector<1x8x240xf32> to vector<1xf32>
    %7 = vector.shape_cast %6 : vector<1xf32> to vector<1x1x1xf32>
    %8 = vector.extract %7[0, 0, 0] : f32 from vector<1x1x1xf32>
    %9 = vector.extract_strided_slice %0 {offsets = [0, 1], sizes = [8, 255], strides = [1, 1]} : vector<8x256xf32> to vector<8x255xf32>
    %10 = vector.extract_strided_slice %0 {offsets = [0, 0], sizes = [8, 255], strides = [1, 1]} : vector<8x256xf32> to vector<8x255xf32>
    %11 = arith.subf %9, %10 : vector<8x255xf32>
    %12 = math.absf %11 : vector<8x255xf32>
    %c0_1 = arith.constant 0 : index
    %c0_2 = arith.constant 0 : index
    %13 = vector.load %arg2[%c0_1, %c0_2] : memref<1x255xf32, #tpu.memory_space<vmem>>, vector<1x255xf32>
    %14 = vector.broadcast %13 : vector<1x255xf32> to vector<8x255xf32>
    %15 = arith.mulf %12, %14 : vector<8x255xf32>
    %16 = vector.shape_cast %15 : vector<8x255xf32> to vector<1x8x255xf32>
    %cst_3 = arith.constant dense<0.000000e+00> : vector<1xf32>
    %17 = vector.multi_reduction <add>, %16, %cst_3 [1, 2] : vector<1x8x255xf32> to vector<1xf32>
    %18 = vector.shape_cast %17 : vector<1xf32> to vector<1x1x1xf32>
    %19 = vector.extract %18[0, 0, 0] : f32 from vector<1x1x1xf32>
    %cst_4 = arith.constant 0.00416666688 : f32
    %20 = arith.mulf %8, %cst_4 : f32
    %cst_5 = arith.constant 0.00416666688 : f32
    %21 = arith.mulf %19, %cst_5 : f32
    %22 = arith.addf %20, %21 : f32
    %23 = vector.broadcast %22 : f32 to vector<1x8x128xf32>
    %c0_6 = arith.constant 0 : index
    %c0_7 = arith.constant 0 : index
    %c0_8 = arith.constant 0 : index
    %24 = vector.load %arg3[%c0_6, %c0_7, %c0_8] : memref<1x8x128xf32, #tpu.memory_space<vmem>>, vector<1x8x128xf32>
    tpu.vector_store %arg3[%c0_6, %c0_7, %c0_8], %23 {strides = array<i32>} : memref<1x8x128xf32, #tpu.memory_space<vmem>>, vector<1x8x128xf32>,
    return
  }
  func.func @transform_0(%arg0: i32) -> (i32, i32) {
    %c0_i32 = arith.constant 0 : i32
    %c0_i32_0 = arith.constant 0 : i32
    return %arg0, %c0_i32 : i32, i32
  }
  func.func @transform_1(%arg0: i32) -> (i32, i32) {
    %c0_i32 = arith.constant 0 : i32
    %c0_i32_0 = arith.constant 0 : i32
    %c0_i32_1 = arith.constant 0 : i32
    return %c0_i32, %c0_i32_0 : i32, i32
  }
  func.func @transform_2(%arg0: i32) -> (i32, i32, i32) {
    %c0_i32 = arith.constant 0 : i32
    %c0_i32_0 = arith.constant 0 : i32
    %c0_i32_1 = arith.constant 0 : i32
    return %arg0, %c0_i32, %c0_i32_0 : i32, i32, i32
  }
}

</mosaic_0001>

<llo_original>
// kernel: tpu_custom_call.1
$region0: #{tpu_custom_call.1}
  #allocation0 [shape = 'u32[]', space=smem, size = 0x4, offset = 0x4, fixed_abs, tag = 'smem constant byte address 0x4 - core index']
  #allocation1 [shape = 'u32[144,128]{1,0:T(1,128)}', space=vmem, size = 0x12000, scoped, tag = 'internal scratch']
  %s0 = inlined_call_operand.hbm [shape: f32[8,256], index: 0, kind: input, shape index: {}]
  %s1 = inlined_call_operand.vmem [shape: f32[1,255], index: 1, kind: input, shape index: {}]
  %s2 = inlined_call_operand.hbm [shape: f32[1,8,128], index: 2, kind: output, shape index: {}]
  %s3 = sld [smem:[#allocation0]]
  $region22: #{tpu_custom_call.1} parent=0
    _
  %s5 = ssub.s32 1, %s3
  %s6 = scalar_select 0, %s5, %s3
  $region1: #{tpu_custom_call.1} parent=0
    #allocation2 [shape = 'u8[8192]{0}', space=vmem, size = 0x2000, scoped, tag = 'input window, operand 0, single buffered']
    #allocation3 [shape = 's32[1]{0}', space=sflag, size = 0x4, scoped, tag = 'scoped memory for tpu_custom_call.1']
    #allocation4 [shape = 's32[1]{0}', space=sflag, size = 0x4, scoped, tag = 'scoped memory for tpu_custom_call.1']
    #allocation5 [shape = 'u8[4096]{0}', space=vmem, size = 0x1000, scoped, tag = 'output window, operand 0, single buffered']
    %7 = vsyncpa [#allocation3], 0
    %8 = vsyncpa [#allocation4], 0
    // Predicated region
    $region2: #{tpu_custom_call.1} parent=1 // pred_check
      _
    $region3: #{tpu_custom_call.1} parent=1 // pred_check_branch
      %10 = sbr.rel (0) target = $region5
    $region4: #{tpu_custom_call.1} parent=1 // pred_region
      %s12 = ssub.s32 256, 256
      %13 = vsyncadd [#allocation3], %s12
      %s15 = sshll.u32 [#allocation2], 4
      %s16 = int_to_ptr.vmem [resolvable:$true] %s15
      %18 = dma.hbm_to_vmem [thread:$0]  %s0, 256, %s16, [#allocation3]
    $region5: #{tpu_custom_call.1} parent=1 // pred_fallthru
      _
    // Predicated region
    $region6: #{tpu_custom_call.1} parent=1 // pred_check
      _
    $region7: #{tpu_custom_call.1} parent=1 // pred_check_branch
      %20 = sbr.rel (0) target = $region9
    $region8: #{tpu_custom_call.1} parent=1 // pred_region
      _
    $region9: #{tpu_custom_call.1} parent=1 // pred_fallthru
      _
    // Predicated region
    $region10: #{tpu_custom_call.1} parent=1 // pred_check
      _
    $region11: #{tpu_custom_call.1} parent=1 // pred_check_branch
      %22 = sbr.rel (0) target = $region13
    $region12: #{tpu_custom_call.1} parent=1 // pred_region
      %23 = dma.done [#allocation3], 256
    $region13: #{tpu_custom_call.1} parent=1 // pred_fallthru
      _
    %v24 = vld [vmem:[#allocation2] sm:$0xff]
    %v25 = vld [vmem:[#allocation2 + $0x8] sm:$0xff]
    %28 = vrot.lane.b32.xlu0 %v24, 16
    %v29 = vpop.permute.xlu0 %28
    %30 = vrot.lane.b32.xlu0 %v25, 16
    %v31 = vpop.permute.xlu0 %30
    %vm32 = vcmask 130048
    %v33 = vsel %vm32, %v29, %v31
    %v36 = vsub.f32 %v24, %v29
    %v37 = vsub.f32 %v25, %v33
    %v38 = vand.u32 2147483647, %v36
    %v39 = vand.u32 2147483647, %v37
    %42 = vrot.lane.b32.xlu0 %v38, 112
    %v43 = vpop.permute.xlu0 %42
    %44 = vrot.lane.b32.xlu0 %v39, 112
    %v45 = vpop.permute.xlu0 %44
    %vm46 = vcmask 916480
    %v47 = vsel %vm46, %v43, %v45
    %v50 = vsel %vm46, %v45, 0.0
    %v51 = vadd.f32 %v47, %v50
    %52 = vadd.xlane.f32.xlu0 %v51
    %v53 = vpop.xlane.xlu0 %52
    %v54 = vrot.slane %v53, 4
    %v55 = vadd.f32 %v53, %v54
    %v56 = vrot.slane %v55, 2
    %v57 = vadd.f32 %v55, %v56
    %v58 = vrot.slane %v57, 1
    %v59 = vadd.f32 %v57, %v58
    %s60 = vtos %v59
    %61 = vrot.lane.b32.xlu0 %v24, 1
    %v62 = vpop.permute.xlu0 %61
    %63 = vrot.lane.b32.xlu0 %v25, 1
    %v64 = vpop.permute.xlu0 %63
    %vm65 = vcmask 7168
    %v66 = vsel %vm65, %v62, %v64
    %v69 = vsub.f32 %v24, %v62
    %v70 = vsub.f32 %v25, %v66
    %v71 = vand.u32 2147483647, %v69
    %v72 = vand.u32 2147483647, %v70
    %v73 = vld [vmem:[%s1] sm:$0x3]
    %v75 = vlaneseq
    %v76 = vshrl.u32 %v75, 7
    %v77 = vsub.s32 0, %v76
    %v78 = vrot.slane %v73, %v77
    %v79 = vlaneseq
    %v80 = vshrl.u32 %v79, 7
    %v81 = vsub.s32 1, %v80
    %v82 = vrot.slane %v73, %v81
    %83 = vrot.lane.b32.xlu0 %v78, 1
    %v84 = vpop.permute.xlu0 %83
    %85 = vrot.lane.b32.xlu0 %v82, 1
    %v86 = vpop.permute.xlu0 %85
    %v87 = vsel %vm65, %v84, %v86
    %v90 = vmul.f32 %v71, %v84
    %v91 = vmul.f32 %v72, %v87
    %94 = vrot.lane.b32.xlu0 %v90, 127
    %v95 = vpop.permute.xlu0 %94
    %96 = vrot.lane.b32.xlu0 %v91, 127
    %v97 = vpop.permute.xlu0 %96
    %vm98 = vcmask 1039360
    %v99 = vsel %vm98, %v95, %v97
    %v102 = vsel %vm98, %v97, 0.0
    %v103 = vadd.f32 %v99, %v102
    %104 = vadd.xlane.f32.xlu0 %v103
    %v105 = vpop.xlane.xlu0 %104
    %v106 = vrot.slane %v105, 4
    %v107 = vadd.f32 %v105, %v106
    %v108 = vrot.slane %v107, 2
    %v109 = vadd.f32 %v107, %v108
    %v110 = vrot.slane %v109, 1
    %v111 = vadd.f32 %v109, %v110
    %s112 = vtos %v111
    %s113 = smul.f32 %s60, 0.004166667
    %s114 = smul.f32 %s112, 0.004166667
    %s115 = sadd.f32 %s113, %s114
    %v116 = vstv %s115
    %117 = vst [vmem:[#allocation5] sm:$0xff] %v116
    // Predicated region
    $region14: #{tpu_custom_call.1} parent=1 // pred_check
      _
    $region15: #{tpu_custom_call.1} parent=1 // pred_check_branch
      %119 = sbr.rel (0) target = $region17
    $region16: #{tpu_custom_call.1} parent=1 // pred_region
      %s121 = ssub.s32 128, 128
      %122 = vsyncadd [#allocation4], %s121
      %s124 = sshll.u32 [#allocation5], 4
      %s125 = int_to_ptr.vmem [resolvable:$true] %s124
      %127 = dma.vmem_to_hbm [thread:$0]  %s125, 128, %s2, [#allocation4]
    $region17: #{tpu_custom_call.1} parent=1 // pred_fallthru
      _
    // Predicated region
    $region18: #{tpu_custom_call.1} parent=1 // pred_check
      _
    $region19: #{tpu_custom_call.1} parent=1 // pred_check_branch
      %129 = sbr.rel (0) target = $region21
    $region20: #{tpu_custom_call.1} parent=1 // pred_region
      %130 = dma.done [#allocation4], 128
    $region21: #{tpu_custom_call.1} parent=1 // pred_fallthru
      _
    %131 = vsyncpa [#allocation3], 1
    %132 = vsyncpa [#allocation4], 1

</llo_original>
